<compile_context>
chip_gen: v7x
topology: tpu7x:2x2x1
jax: 0.10.0
libtpu: 0.0.40
codegen_flags: <defaults>
</compile_context>

<pallas_src>
import math
import functools

import jax
import jax.numpy as jnp
from jax.experimental import pallas as pl
from jax.experimental.pallas import tpu as pltpu


def _tile(n, target):
    """Pick `target` if it evenly divides n, otherwise fall back to the full extent."""
    return target if n % target == 0 else n


# ---------------------------------------------------------------------------
# Stage 1 / 3: tiled linear layer  y = x @ W  (W passed pre-transposed, bf16)
# ---------------------------------------------------------------------------
def _linear_kernel(x_ref, w_ref, o_ref):
    o_ref[0] = jnp.dot(
        x_ref[0].astype(jnp.bfloat16), w_ref[...],
        preferred_element_type=jnp.float32).astype(o_ref.dtype)


def linear(x, w_t, out_dtype, *, seq_tile=256, n_tile=512):
    """x: (B, S, Din) ; w_t: (Din, Dout) bf16  ->  (B, S, Dout)."""
    B, S, Din = x.shape
    Dout = w_t.shape[1]
    ts = _tile(S, seq_tile)
    tn = _tile(Dout, n_tile)
    # TODO(synk): add K (Din) tiling + f32 accumulator scratch for very large Din.
    return pl.pallas_call(
        _linear_kernel,
        out_shape=jax.ShapeDtypeStruct((B, S, Dout), out_dtype),
        grid_spec=pltpu.PrefetchScalarGridSpec(
            num_scalar_prefetch=0,
            grid=(B, S // ts, Dout // tn),
            in_specs=[
                pl.BlockSpec((1, ts, Din), lambda b, i, j: (b, i, 0)),
                pl.BlockSpec((Din, tn), lambda b, i, j: (0, j)),
            ],
            out_specs=pl.BlockSpec((1, ts, tn), lambda b, i, j: (b, i, j)),
        ),
        compiler_params=pltpu.CompilerParams(
            dimension_semantics=("parallel", "parallel", "parallel")),
    )(x, w_t)


# ---------------------------------------------------------------------------
# Stage 2: flash attention with in-kernel RoPE
# ---------------------------------------------------------------------------
def _rope(t, cos, sin):
    """Rotary embedding on interleaved (real, imag) pairs, lane-parallel.

    Equivalent to apply_rotary_emb's reshape(..., -1, 2) / rotate / re-interleave:
        out = t * cos_dup + pair_swap(t) * sin_signed
    where cos_dup[:, j] = cos(theta_{j//2}),
          sin_signed[:, j] = -sin(theta_{j//2}) for even j, +sin(theta_{j//2}) for odd j,
          pair_swap(t)[:, j] = t[:, j+1] (even j) / t[:, j-1] (odd j).
    pltpu.roll follows jnp.roll semantics: out[..., i] = in[..., (i - shift) % n].
    """
    hd = t.shape[-1]
    fwd = pltpu.roll(t, hd - 1, 1)   # out[:, j] = t[:, (j + 1) % hd]
    bwd = pltpu.roll(t, 1, 1)        # out[:, j] = t[:, (j - 1) % hd]
    lane = jax.lax.broadcasted_iota(jnp.int32, t.shape, 1)
    partner = jnp.where(lane % 2 == 0, fwd, bwd)
    return t * cos + partner * sin


def _flash_attn_kernel(q_ref, k_ref, v_ref, mask_ref,
                       cos_q_ref, sin_q_ref, cos_k_ref, sin_k_ref,
                       o_ref, q_sc, m_sc, l_sc, acc_sc, *, scale):
    ki = pl.program_id(3)

    @pl.when(ki == 0)
    def _init():
        m_sc[...] = jnp.full(m_sc.shape, -jnp.inf, m_sc.dtype)
        l_sc[...] = jnp.zeros(l_sc.shape, l_sc.dtype)
        acc_sc[...] = jnp.zeros(acc_sc.shape, acc_sc.dtype)
        # RoPE + 1/sqrt(head_dim) folded into q, computed once per (b, h, q_tile).
        qf = q_ref[0, 0].astype(jnp.float32) * scale
        q_sc[...] = _rope(qf, cos_q_ref[...], sin_q_ref[...])

    # RoPE on the current k tile (f32 math), then bf16 for the MXU.
    kf = _rope(k_ref[0, 0].astype(jnp.float32), cos_k_ref[...], sin_k_ref[...])

    # scores: contract head_dim of q and k directly (no materialized k.T).
    s = jax.lax.dot_general(
        q_sc[...].astype(jnp.bfloat16), kf.astype(jnp.bfloat16),
        dimension_numbers=(((1,), (1,)), ((), ())),
        preferred_element_type=jnp.float32)              # (tq, tk) f32
    s = s + mask_ref[0]

    # online softmax, kept in f32.
    m_prev = m_sc[...]
    m_new = jnp.maximum(m_prev, jnp.max(s, axis=-1, keepdims=True))
    alpha = jnp.exp(m_prev - m_new)
    p = jnp.exp(s - m_new)
    l_sc[...] = alpha * l_sc[...] + jnp.sum(p, axis=-1, keepdims=True)
    acc_sc[...] = alpha * acc_sc[...] + jnp.dot(
        p.astype(jnp.bfloat16), v_ref[0, 0].astype(jnp.bfloat16),
        preferred_element_type=jnp.float32)
    m_sc[...] = m_new

    @pl.when(ki == pl.num_programs(3) - 1)
    def _finalize():
        inv_l = pl.reciprocal(l_sc[...], approx=True)
        o_ref[0, 0] = (acc_sc[...] * inv_l).astype(o_ref.dtype)


def flash_attention(q, k, v, attn_mask, cos_f, sin_f, *, scale, n_rep,
                    q_tile=256, kv_tile=256):
    """q: (B, H, S, hd) bf16; k/v: (B, Hkv, S, hd) bf16; attn_mask: (B, S, S) f32."""
    B, H, S, hd = q.shape
    tq = _tile(S, q_tile)
    tk = _tile(S, kv_tile)
    kv_head = lambda h: h // n_rep

    kernel = functools.partial(_flash_attn_kernel, scale=scale)
    return pl.pallas_call(
        kernel,
        out_shape=jax.ShapeDtypeStruct((B, H, S, hd), jnp.bfloat16),
        grid_spec=pltpu.PrefetchScalarGridSpec(
            num_scalar_prefetch=0,
            grid=(B, H, S // tq, S // tk),
            in_specs=[
                pl.BlockSpec((1, 1, tq, hd), lambda b, h, qi, ki: (b, h, qi, 0)),
                pl.BlockSpec((1, 1, tk, hd),
                             lambda b, h, qi, ki: (b, kv_head(h), ki, 0)),
                pl.BlockSpec((1, 1, tk, hd),
                             lambda b, h, qi, ki: (b, kv_head(h), ki, 0)),
                pl.BlockSpec((1, tq, tk), lambda b, h, qi, ki: (b, qi, ki)),
                pl.BlockSpec((tq, hd), lambda b, h, qi, ki: (qi, 0)),
                pl.BlockSpec((tq, hd), lambda b, h, qi, ki: (qi, 0)),
                pl.BlockSpec((tk, hd), lambda b, h, qi, ki: (ki, 0)),
                pl.BlockSpec((tk, hd), lambda b, h, qi, ki: (ki, 0)),
            ],
            out_specs=pl.BlockSpec((1, 1, tq, hd),
                                   lambda b, h, qi, ki: (b, h, qi, 0)),
            scratch_shapes=[
                pltpu.VMEM((tq, hd), jnp.float32),   # roped + scaled q
                pltpu.VMEM((tq, 1), jnp.float32),    # running max
                pltpu.VMEM((tq, 1), jnp.float32),    # running denominator
                pltpu.VMEM((tq, hd), jnp.float32),   # output accumulator
            ],
        ),
        compiler_params=pltpu.CompilerParams(
            dimension_semantics=("parallel", "parallel", "parallel", "arbitrary")),
    )(q, k, v, attn_mask, cos_f, sin_f, cos_f, sin_f)


# ---------------------------------------------------------------------------
# Full forward
# ---------------------------------------------------------------------------
def attention_forward(x, attn_mask, freqs_cos, freqs_sin, wq, wk, wv, wo,
                      n_heads, n_kv_heads=None):
    """Inference forward of Attention (self-attention path, dropout p=0).

    x: (B, S, dim) f32; attn_mask: (B, S, S) additive f32 mask;
    freqs_cos/sin: (S, head_dim//2) f32; wq/wk/wv/wo: PyTorch (out, in) layout.
    """
    B, S, D = x.shape
    if n_kv_heads is None:
        n_kv_heads = n_heads
    assert n_heads % n_kv_heads == 0
    head_dim = D // n_heads
    n_rep = n_heads // n_kv_heads
    hdq = n_heads * head_dim
    hdkv = n_kv_heads * head_dim

    # Fused QKV weight, pre-transposed to (in, out) and cast to bf16 for the MXU.
    wqkv_t = jnp.concatenate([wq.T, wk.T, wv.T], axis=1).astype(jnp.bfloat16)
    wo_t = wo.T.astype(jnp.bfloat16)

    # Shared (S, head_dim) rotary tables: per-pair duplicated cos, sign-folded sin.
    cos_f = jnp.repeat(freqs_cos.astype(jnp.float32), 2, axis=1)          # (S, hd)
    sin_f = jnp.repeat(freqs_sin.astype(jnp.float32), 2, axis=1)
    sign = jnp.where(jnp.arange(head_dim) % 2 == 0, -1.0, 1.0).astype(jnp.float32)
    sin_f = sin_f * sign[None, :]

    # Stage 1: fused QKV projection (bf16 MXU, f32 accumulation).
    qkv = linear(x, wqkv_t, jnp.bfloat16)                 # (B, S, hdq + 2*hdkv)

    # Head-major layout for the attention core (XLA reshape/transpose between
    # kernels keeps per-head BlockSpecs legal for any head_dim).
    q = qkv[:, :, :hdq].reshape(B, S, n_heads, head_dim).transpose(0, 2, 1, 3)
    k = qkv[:, :, hdq:hdq + hdkv].reshape(B, S, n_kv_heads, head_dim).transpose(0, 2, 1, 3)
    v = qkv[:, :, hdq + hdkv:].reshape(B, S, n_kv_heads, head_dim).transpose(0, 2, 1, 3)

    # Stage 2: flash attention core (RoPE + online softmax in-kernel).
    ctx = flash_attention(q, k, v, attn_mask, cos_f, sin_f,
                          scale=1.0 / math.sqrt(head_dim), n_rep=n_rep)
    ctx = ctx.transpose(0, 2, 1, 3).reshape(B, S, hdq)

    # Stage 3: output projection.
    # TODO(synk): kv_cache / kv_state (cross-attention) and training-mode dropout
    # paths are not implemented.
    return linear(ctx, wo_t, x.dtype)


if __name__ == "__main__":
    # Small but TPU-friendly shapes (head_dim and dim multiples of 128 so every
    # block is lane-dense): dim=256, n_heads = n_kv_heads = 2, seq=128, batch=2.
    B, S, D, H = 2, 128, 256, 2
    hd = D // H

    key = jax.random.PRNGKey(0)
    kx, kq, kk, kv, ko = jax.random.split(key, 5)
    x = jax.random.normal(kx, (B, S, D), dtype=jnp.float32)

    # nn.Linear weights, PyTorch layout (out_features, in_features), bias=False.
    wq = jax.random.normal(kq, (D, D), dtype=jnp.float32) * 0.05
    wk = jax.random.normal(kk, (D, D), dtype=jnp.float32) * 0.05
    wv = jax.random.normal(kv, (D, D), dtype=jnp.float32) * 0.05
    wo = jax.random.normal(ko, (D, D), dtype=jnp.float32) * 0.05

    # Additive float attention mask (causal bias, finite large negative).
    causal = jnp.triu(jnp.full((S, S), -1e9, dtype=jnp.float32), k=1)
    attn_mask = jnp.broadcast_to(causal, (B, S, S))

    # llama-style rotary frequency tables: (S, head_dim // 2).
    inv_freq = 1.0 / (10000.0 ** (jnp.arange(0, hd, 2, dtype=jnp.float32) / hd))
    t = jnp.arange(S, dtype=jnp.float32)
    freqs = jnp.outer(t, inv_freq)
    freqs_cos = jnp.cos(freqs)
    freqs_sin = jnp.sin(freqs)

    out = attention_forward(x, attn_mask, freqs_cos, freqs_sin, wq, wk, wv, wo,
                            n_heads=H, n_kv_heads=H)
    jax.block_until_ready(out)
    assert out.shape == (B, S, D)
    assert bool(jnp.isfinite(out).all())
    print("KERNEL_OK")
</pallas_src>

<mosaic_0001>
module attributes {stable_mosaic.version = 11 : i64} {
  func.func @_linear_kernel(%arg0: i32, %arg1: i32, %arg2: i32, %arg3: memref<1x128x256xf32, #tpu.memory_space<vmem>>, %arg4: memref<256x768xbf16, #tpu.memory_space<vmem>>, %arg5: memref<1x128x768xbf16, #tpu.memory_space<vmem>>) attributes {dimension_semantics = [#tpu.dimension_semantics<parallel>, #tpu.dimension_semantics<parallel>, #tpu.dimension_semantics<parallel>], iteration_bounds = array<i64: 2, 1, 1>, scalar_prefetch = 0 : i64, scratch_operands = 0 : i64, tpu.core_type = #tpu.core_type<tc>, window_params = [{transform_indices = @transform_0, window_bounds = array<i64: 1, 128, 256>}, {transform_indices = @transform_1, window_bounds = array<i64: 256, 768>}, {transform_indices = @transform_2, window_bounds = array<i64: 1, 128, 768>}]} {
    %c0 = arith.constant 0 : index
    %c0_0 = arith.constant 0 : index
    %c0_1 = arith.constant 0 : index
    %0 = vector.load %arg3[%c0, %c0_0, %c0_1] : memref<1x128x256xf32, #tpu.memory_space<vmem>>, vector<1x128x256xf32>
    %1 = vector.shape_cast %0 : vector<1x128x256xf32> to vector<128x256xf32>
    %2 = arith.truncf %1 : vector<128x256xf32> to vector<128x256xbf16>
    %c0_2 = arith.constant 0 : index
    %c0_3 = arith.constant 0 : index
    %3 = vector.load %arg4[%c0_2, %c0_3] : memref<256x768xbf16, #tpu.memory_space<vmem>>, vector<256x768xbf16>
    %cst = arith.constant dense<0.000000e+00> : vector<128x768xf32>
    %4 = tpu.matmul %2, %3, %cst {dimension_numbers = #tpu.dot_dimension_numbers<[1], [0], [0], [1], [0, 0, 1, 1], [], []>} : vector<128x256xbf16>, vector<256x768xbf16>, vector<128x768xf32> -> vector<128x768xf32>
    %5 = arith.truncf %4 : vector<128x768xf32> to vector<128x768xbf16>
    %c0_4 = arith.constant 0 : index
    %c0_5 = arith.constant 0 : index
    %c0_6 = arith.constant 0 : index
    %6 = vector.load %arg5[%c0_4, %c0_5, %c0_6] : memref<1x128x768xbf16, #tpu.memory_space<vmem>>, vector<1x128x768xbf16>
    %7 = vector.shape_cast %6 : vector<1x128x768xbf16> to vector<128x768xbf16>
    %8 = vector.shape_cast %5 : vector<128x768xbf16> to vector<1x128x768xbf16>
    tpu.vector_store %arg5[%c0_4, %c0_5, %c0_6], %8 {strides = array<i32>} : memref<1x128x768xbf16, #tpu.memory_space<vmem>>, vector<1x128x768xbf16>,
    return
  }
  func.func @transform_0(%arg0: i32, %arg1: i32, %arg2: i32) -> (i32, i32, i32) {
    %c0_i32 = arith.constant 0 : i32
    %c0_i32_0 = arith.constant 0 : i32
    return %arg0, %arg1, %c0_i32 : i32, i32, i32
  }
  func.func @transform_1(%arg0: i32, %arg1: i32, %arg2: i32) -> (i32, i32) {
    %c0_i32 = arith.constant 0 : i32
    %c0_i32_0 = arith.constant 0 : i32
    return %c0_i32, %arg2 : i32, i32
  }
  func.func @transform_2(%arg0: i32, %arg1: i32, %arg2: i32) -> (i32, i32, i32) {
    %c0_i32 = arith.constant 0 : i32
    return %arg0, %arg1, %arg2 : i32, i32, i32
  }
}

</mosaic_0001>

<llo_original>
// kernel: tpu_custom_call.1
$region0: #{tpu_custom_call.1}
  #allocation0 [shape = 'u32[]', space=smem, size = 0x4, offset = 0x4, fixed_abs, tag = 'smem constant byte address 0x4 - core index']
  #allocation1 [shape = 'u32[144,128]{1,0:T(1,128)}', space=vmem, size = 0x12000, scoped, tag = 'internal scratch']
  %s0 = inlined_call_operand.hbm [shape: f32[2,128,256], index: 0, kind: input, shape index: {}]
  %s1 = inlined_call_operand.hbm [shape: bf16[256,768], index: 1, kind: input, shape index: {}]
  %s2 = inlined_call_operand.hbm [shape: bf16[2,128,768], index: 2, kind: output, shape index: {}]
  %s3 = sld [smem:[#allocation0]]
  $region49: #{tpu_custom_call.1} parent=0
    _
  %s5 = ssub.s32 1, %s3
  %s6 = scalar_select 0, %s5, %s3
  $region1: #{tpu_custom_call.1} parent=0
    #allocation2 [shape = 'u8[262144]{0}', space=vmem, size = 0x40000, scoped, tag = 'input window, operand 0']
    #allocation3 [shape = 's32[2]{0}', space=sflag, size = 0x8, scoped, tag = 'scoped memory for tpu_custom_call.1']
    #allocation4 [shape = 's32[2]{0}', space=sflag, size = 0x8, scoped, tag = 'scoped memory for tpu_custom_call.1']
    #allocation5 [shape = 'u8[393216]{0}', space=vmem, size = 0x60000, scoped, tag = 'input window, operand 1, single buffered']
    #allocation6 [shape = 's32[1]{0}', space=sflag, size = 0x4, scoped, tag = 'scoped memory for tpu_custom_call.1']
    #allocation7 [shape = 'u8[393216]{0}', space=vmem, size = 0x60000, scoped, tag = 'output window, operand 0']
    %7 = vsyncpa [#allocation3], 0
    %s8 = scalar_lea.sflag [#allocation3], 1
    %9 = vsyncpa %s8, 0
    %10 = vsyncpa [#allocation6], 0
    %11 = vsyncpa [#allocation4], 0
    %s12 = scalar_lea.sflag [#allocation4], 1
    %13 = vsyncpa %s12, 0
    loop: start=0, step=1, limit=4
    $region2: #{tpu_custom_call.1} parent=1 // loop_pre_header
      _
    $region3: #{tpu_custom_call.1} parent=1 // loop_header
      %s15 = sphi 0, %s19
      %p16 = scmp.ge.s32.totalorder %s15, 4
      %s22 = sphi 0, %s41
      %s23 = sphi 0, %s37
      %s24 = sphi 0, %s33
      %s25 = sphi 0, %s22
      %s26 = sphi 0, %s23
      %s27 = sphi 0, %s24
      %s28 = sphi 0, %s25
      %s29 = sphi 0, %s26
      %s30 = sphi 0, %s27
      %s46 = sphi 0, %s48
      %s49 = sphi 0, %s46
      %s50 = sphi 0, %s49
      %s66 = sphi 0, %s50
      %s72 = sphi 0, %s74
      %s75 = sphi 0, %s72
      %s76 = sphi 0, %s75
      %s92 = sphi 0, %s76
      %s102 = sphi 0, %s104
      %s105 = sphi 0, %s102
      %s106 = sphi 0, %s105
      %s122 = sphi 0, %s106
    $region4: #{tpu_custom_call.1} parent=1 // loop_header_branch
      %18 = sbr.rel (%p16) target = $region8
    $region5: #{tpu_custom_call.1} parent=1 // loop_body
      %s20 = ssub.s32 %s15, 1
      %s21 = ssub.s32 %s15, 2
      %s31 = sadd.s32 1, %s24
      %p32 = scmp.ge.s32.totalorder %s31, 1
      %s33 = scalar_select %p32, 0, %s31
      %s34 = sadd.s32 1, %s23
      %s35 = scalar_select %p32, %s34, %s23
      %p36 = scmp.ge.s32.totalorder %s35, 1
      %s37 = scalar_select %p36, 0, %s35
      %s38 = sadd.s32 1, %s22
      %s39 = scalar_select %p36, %s38, %s22
      %p40 = scmp.ge.s32.totalorder %s39, 2
      %s41 = scalar_select %p40, 0, %s39
      %s42 = ssub.s32 %s22, %s41
      %s43 = ssub.s32 %s23, %s37
      %s44 = sor.u32 %s42, %s43
      %p45 = scmp.eq.s32.totalorder %s44, 0
      %s47 = sadd.s32 %s46, 1
      %s48 = scalar_select %p45, %s46, %s47
      %p51 = pneg %p45
      %p52 = scmp.eq.s32.totalorder %s15, 1
      %p53 = por %p51, %p52
      %p54 = scmp.ne.s32.totalorder %s46, %s49
      %p55 = scmp.eq.s32.totalorder %s15, 0
      %p56 = por %p54, %p55
      %p57 = scmp.ne.s32.totalorder %s46, %s49
      %p58 = scmp.eq.s32.totalorder %s20, 1
      %p59 = por %p57, %p58
      %p60 = scmp.ne.s32.totalorder %s49, %s50
      %p61 = scmp.eq.s32.totalorder %s20, 0
      %p62 = por %p60, %p61
      %p63 = scmp.ne.s32.totalorder %s49, %s50
      %p64 = scmp.eq.s32.totalorder %s21, 1
      %p65 = por %p63, %p64
      %p67 = scmp.ne.s32.totalorder %s50, %s66
      %p68 = scmp.eq.s32.totalorder %s21, 0
      %p69 = por %p67, %p68
      %s70 = ssub.s32 %s24, %s33
      %p71 = scmp.eq.s32.totalorder %s70, 0
      %s73 = sadd.s32 %s72, 1
      %s74 = scalar_select %p71, %s72, %s73
      %p77 = pneg %p71
      %p78 = scmp.eq.s32.totalorder %s15, 1
      %p79 = por %p77, %p78
      %p80 = scmp.ne.s32.totalorder %s72, %s75
      %p81 = scmp.eq.s32.totalorder %s15, 0
      %p82 = por %p80, %p81
      %p83 = scmp.ne.s32.totalorder %s72, %s75
      %p84 = scmp.eq.s32.totalorder %s20, 1
      %p85 = por %p83, %p84
      %p86 = scmp.ne.s32.totalorder %s75, %s76
      %p87 = scmp.eq.s32.totalorder %s20, 0
      %p88 = por %p86, %p87
      %p89 = scmp.ne.s32.totalorder %s75, %s76
      %p90 = scmp.eq.s32.totalorder %s21, 1
      %p91 = por %p89, %p90
      %p93 = scmp.ne.s32.totalorder %s76, %s92
      %p94 = scmp.eq.s32.totalorder %s21, 0
      %p95 = por %p93, %p94
      %s96 = ssub.s32 %s22, %s41
      %s97 = ssub.s32 %s23, %s37
      %s98 = sor.u32 %s96, %s97
      %s99 = ssub.s32 %s24, %s33
      %s100 = sor.u32 %s98, %s99
      %p101 = scmp.eq.s32.totalorder %s100, 0
      %s103 = sadd.s32 %s102, 1
      %s104 = scalar_select %p101, %s102, %s103
      %p107 = pneg %p101
      %p108 = scmp.eq.s32.totalorder %s15, 1
      %p109 = por %p107, %p108
      %p110 = scmp.ne.s32.totalorder %s102, %s105
      %p111 = scmp.eq.s32.totalorder %s15, 0
      %p112 = por %p110, %p111
      %p113 = scmp.ne.s32.totalorder %s102, %s105
      %p114 = scmp.eq.s32.totalorder %s20, 1
      %p115 = por %p113, %p114
      %p116 = scmp.ne.s32.totalorder %s105, %s106
      %p117 = scmp.eq.s32.totalorder %s20, 0
      %p118 = por %p116, %p117
      %p119 = scmp.ne.s32.totalorder %s105, %s106
      %p120 = scmp.eq.s32.totalorder %s21, 1
      %p121 = por %p119, %p120
      %p123 = scmp.ne.s32.totalorder %s106, %s122
      %p124 = scmp.eq.s32.totalorder %s21, 0
      %p125 = por %p123, %p124
      %p126 = scmp.le.s32.totalorder 1, %s15
      %p127 = scmp.lt.s32.totalorder %s15, 3
      %p128 = pnand %p126, %p127
      %p129 = pneg %p128
      // Predicated region
      $region9: #{tpu_custom_call.1} parent=5 // pred_check
        _
      $region10: #{tpu_custom_call.1} parent=5 // pred_check_branch
        %131 = sbr.rel (%p128) target = $region12
      $region11: #{tpu_custom_call.1} parent=5 // pred_region
        %s132 = ssub.s32 %s15, 1
        // Predicated region
        $region13: #{tpu_custom_call.1} parent=11 // pred_check
          %p133 = pneg %p88
        $region14: #{tpu_custom_call.1} parent=11 // pred_check_branch
          %135 = sbr.rel (%p133) target = $region16
        $region15: #{tpu_custom_call.1} parent=11 // pred_region
          %s136 = smul.u32 6, %s27
          %s138 = ssub.s32 12288, 12288
          %139 = vsyncadd [#allocation6], %s138
          %s140 = smul.addr %s136, 64
          %s141 = scalar_lea.hbm %s1, %s140
          %s142 = sshll.u32 [#allocation5], 4
          %s143 = int_to_ptr.vmem [resolvable:$true] %s142
          %148 = dma.hbm_to_vmem [thread:$0]  %s141, 12288, %s143, [#allocation6], 384, 384, 24
        $region16: #{tpu_custom_call.1} parent=11 // pred_fallthru
          _
      $region12: #{tpu_custom_call.1} parent=5 // pred_fallthru
        _
      %p149 = scmp.lt.s32.totalorder %s15, 2
      // Predicated region
      $region17: #{tpu_custom_call.1} parent=5 // pred_check
        %p150 = pneg %p149
      $region18: #{tpu_custom_call.1} parent=5 // pred_check_branch
        %152 = sbr.rel (%p150) target = $region20
      $region19: #{tpu_custom_call.1} parent=5 // pred_region
        // Predicated region
        $region21: #{tpu_custom_call.1} parent=19 // pred_check
          %p153 = pneg %p56
        $region22: #{tpu_custom_call.1} parent=19 // pred_check_branch
          %155 = sbr.rel (%p153) target = $region24
        $region23: #{tpu_custom_call.1} parent=19 // pred_region
          %s156 = sand.u32 %s46, 1
          %s157 = scalar_lea.sflag [#allocation3], %s156
          %s158 = sand.u32 %s46, 1
          %s159 = smul.addr %s158, 256
          %s160 = scalar_lea.vmem [#allocation2], %s159
          %s161 = smul.u32 16, %s23
          %s163 = ssub.s32 4096, 4096
          %164 = vsyncadd %s157, %s163
          %s165 = smul.addr %s161, 2
          %s166 = smul.addr %s22, 32
          %s167 = sadd.s32 %s165, %s166
          %s168 = smul.addr %s167, 128
          %s169 = scalar_lea.hbm %s0, %s168
          %s170 = sshll.u32 %s160, 4
          %s171 = int_to_ptr.vmem [resolvable:$true] %s170
          %176 = dma.hbm_to_vmem [thread:$0]  %s169, 4096, %s171, %s157, 256, 256, 16
        $region24: #{tpu_custom_call.1} parent=19 // pred_fallthru
          _
      $region20: #{tpu_custom_call.1} parent=5 // pred_fallthru
        _
      %p177 = scmp.le.s32.totalorder 1, %s15
      %p178 = scmp.lt.s32.totalorder %s15, 3
      %p179 = pnand %p177, %p178
      %p180 = pneg %p179
      // Predicated region
      $region25: #{tpu_custom_call.1} parent=5 // pred_check
        _
      $region26: #{tpu_custom_call.1} parent=5 // pred_check_branch
        %182 = sbr.rel (%p179) target = $region28
      $region27: #{tpu_custom_call.1} parent=5 // pred_region
        %s183 = ssub.s32 %s15, 1
        %s184 = sand.u32 %s49, 1
        %s185 = scalar_lea.sflag [#allocation3], %s184
        %s186 = sand.u32 %s49, 1
        %s187 = smul.addr %s186, 256
        %s188 = scalar_lea.vmem [#allocation2], %s187
        // Predicated region
        $region29: #{tpu_custom_call.1} parent=27 // pred_check
          %p189 = pneg %p62
        $region30: #{tpu_custom_call.1} parent=27 // pred_check_branch
          %191 = sbr.rel (%p189) target = $region32
        $region31: #{tpu_custom_call.1} parent=27 // pred_region
          %192 = dma.done %s185, 4096
        $region32: #{tpu_custom_call.1} parent=27 // pred_fallthru
          _
        // Predicated region
        $region33: #{tpu_custom_call.1} parent=27 // pred_check
          %p193 = pneg %p88
        $region34: #{tpu_custom_call.1} parent=27 // pred_check_branch
          %195 = sbr.rel (%p193) target = $region36
        $region35: #{tpu_custom_call.1} parent=27 // pred_region
          %196 = dma.done [#allocation6], 12288
        $region36: #{tpu_custom_call.1} parent=27 // pred_fallthru
          _
        %s197 = sand.u32 %s49, 1
        %s198 = scalar_lea.sflag [#allocation3], %s197
        %s199 = sand.u32 %s49, 1
        %s200 = smul.addr %s199, 256
        %s201 = scalar_lea.vmem [#allocation2], %s200
        %p202 = pneg %p62
        %p203 = pneg %p59
        %p204 = pneg %p88
        %p205 = pneg %p85
        %p206 = pneg %p118
        %p207 = pneg %p115
        %s208 = sand.u32 %s105, 1
        %s209 = scalar_lea.sflag [#allocation4], %s208
        %s210 = sand.u32 %s105, 1
        %s211 = smul.addr %s210, 384
        %s212 = scalar_lea.vmem [#allocation7], %s211
        %s213 = smul.u32 16, %s26
        %s214 = smul.u32 6, %s27
        %s215 = smul.u32 16, %s26
        %s216 = smul.u32 6, %s27
        %v217 = vld [vmem:[%s188] sm:$0xff]
        %v218 = vld [vmem:[%s188 + $0x8] sm:$0xff]
        %v219 = vld [vmem:[%s188 + $0x10] sm:$0xff]
        %v220 = vld [vmem:[%s188 + $0x18] sm:$0xff]
        %v221 = vld [vmem:[%s188 + $0x20] sm:$0xff]
        %v222 = vld [vmem:[%s188 + $0x28] sm:$0xff]
        %v223 = vld [vmem:[%s188 + $0x30] sm:$0xff]
        %v224 = vld [vmem:[%s188 + $0x38] sm:$0xff]
        %v225 = vld [vmem:[%s188 + $0x40] sm:$0xff]
        %v226 = vld [vmem:[%s188 + $0x48] sm:$0xff]
        %v227 = vld [vmem:[%s188 + $0x50] sm:$0xff]
        %v228 = vld [vmem:[%s188 + $0x58] sm:$0xff]
        %v229 = vld [vmem:[%s188 + $0x60] sm:$0xff]
        %v230 = vld [vmem:[%s188 + $0x68] sm:$0xff]
        %v231 = vld [vmem:[%s188 + $0x70] sm:$0xff]
        %v232 = vld [vmem:[%s188 + $0x78] sm:$0xff]
        %v233 = vld [vmem:[%s188 + $0x80] sm:$0xff]
        %v234 = vld [vmem:[%s188 + $0x88] sm:$0xff]
        %v235 = vld [vmem:[%s188 + $0x90] sm:$0xff]
        %v236 = vld [vmem:[%s188 + $0x98] sm:$0xff]
        %v237 = vld [vmem:[%s188 + $0xa0] sm:$0xff]
        %v238 = vld [vmem:[%s188 + $0xa8] sm:$0xff]
        %v239 = vld [vmem:[%s188 + $0xb0] sm:$0xff]
        %v240 = vld [vmem:[%s188 + $0xb8] sm:$0xff]
        %v241 = vld [vmem:[%s188 + $0xc0] sm:$0xff]
        %v242 = vld [vmem:[%s188 + $0xc8] sm:$0xff]
        %v243 = vld [vmem:[%s188 + $0xd0] sm:$0xff]
        %v244 = vld [vmem:[%s188 + $0xd8] sm:$0xff]
        %v245 = vld [vmem:[%s188 + $0xe0] sm:$0xff]
        %v246 = vld [vmem:[%s188 + $0xe8] sm:$0xff]
        %v247 = vld [vmem:[%s188 + $0xf0] sm:$0xff]
        %v248 = vld [vmem:[%s188 + $0xf8] sm:$0xff]
        %v249 = vpack.c.bf16 %v219, %v217
        %v250 = vpack.c.bf16 %v220, %v218
        %v251 = vpack.c.bf16 %v223, %v221
        %v252 = vpack.c.bf16 %v224, %v222
        %v253 = vpack.c.bf16 %v227, %v225
        %v254 = vpack.c.bf16 %v228, %v226
        %v255 = vpack.c.bf16 %v231, %v229
        %v256 = vpack.c.bf16 %v232, %v230
        %v257 = vpack.c.bf16 %v235, %v233
        %v258 = vpack.c.bf16 %v236, %v234
        %v259 = vpack.c.bf16 %v239, %v237
        %v260 = vpack.c.bf16 %v240, %v238
        %v261 = vpack.c.bf16 %v243, %v241
        %v262 = vpack.c.bf16 %v244, %v242
        %v263 = vpack.c.bf16 %v247, %v245
        %v264 = vpack.c.bf16 %v248, %v246
        %v265 = vld [vmem:[#allocation5] sm:$0xff]
        %v266 = vld [vmem:[#allocation5 + $0x8] sm:$0xff]
        %v267 = vld [vmem:[#allocation5 + $0x10] sm:$0xff]
        %v268 = vld [vmem:[#allocation5 + $0x18] sm:$0xff]
        %v269 = vld [vmem:[#allocation5 + $0x20] sm:$0xff]
        %v270 = vld [vmem:[#allocation5 + $0x28] sm:$0xff]
        %v271 = vld [vmem:[#allocation5 + $0x30] sm:$0xff]
        %v272 = vld [vmem:[#allocation5 + $0x38] sm:$0xff]
        %v273 = vld [vmem:[#allocation5 + $0x40] sm:$0xff]
        %v274 = vld [vmem:[#allocation5 + $0x48] sm:$0xff]
        %v275 = vld [vmem:[#allocation5 + $0x50] sm:$0xff]
        %v276 = vld [vmem:[#allocation5 + $0x58] sm:$0xff]
        %v277 = vld [vmem:[#allocation5 + $0x60] sm:$0xff]
        %v278 = vld [vmem:[#allocation5 + $0x68] sm:$0xff]
        %v279 = vld [vmem:[#allocation5 + $0x70] sm:$0xff]
        %v280 = vld [vmem:[#allocation5 + $0x78] sm:$0xff]
        %v281 = vld [vmem:[#allocation5 + $0x80] sm:$0xff]
        %v282 = vld [vmem:[#allocation5 + $0x88] sm:$0xff]
        %v283 = vld [vmem:[#allocation5 + $0x90] sm:$0xff]
        %v284 = vld [vmem:[#allocation5 + $0x98] sm:$0xff]
        %v285 = vld [vmem:[#allocation5 + $0xa0] sm:$0xff]
        %v286 = vld [vmem:[#allocation5 + $0xa8] sm:$0xff]
        %v287 = vld [vmem:[#allocation5 + $0xb0] sm:$0xff]
        %v288 = vld [vmem:[#allocation5 + $0xb8] sm:$0xff]
        %v289 = vld [vmem:[#allocation5 + $0xc0] sm:$0xff]
        %v290 = vld [vmem:[#allocation5 + $0xc8] sm:$0xff]
        %v291 = vld [vmem:[#allocation5 + $0xd0] sm:$0xff]
        %v292 = vld [vmem:[#allocation5 + $0xd8] sm:$0xff]
        %v293 = vld [vmem:[#allocation5 + $0xe0] sm:$0xff]
        %v294 = vld [vmem:[#allocation5 + $0xe8] sm:$0xff]
        %v295 = vld [vmem:[#allocation5 + $0xf0] sm:$0xff]
        %v296 = vld [vmem:[#allocation5 + $0xf8] sm:$0xff]
        %v297 = vld [vmem:[#allocation5 + $0x100] sm:$0xff]
        %v298 = vld [vmem:[#allocation5 + $0x108] sm:$0xff]
        %v299 = vld [vmem:[#allocation5 + $0x110] sm:$0xff]
        %v300 = vld [vmem:[#allocation5 + $0x118] sm:$0xff]
        %v301 = vld [vmem:[#allocation5 + $0x120] sm:$0xff]
        %v302 = vld [vmem:[#allocation5 + $0x128] sm:$0xff]
        %v303 = vld [vmem:[#allocation5 + $0x130] sm:$0xff]
        %v304 = vld [vmem:[#allocation5 + $0x138] sm:$0xff]
        %v305 = vld [vmem:[#allocation5 + $0x140] sm:$0xff]
        %v306 = vld [vmem:[#allocation5 + $0x148] sm:$0xff]
        %v307 = vld [vmem:[#allocation5 + $0x150] sm:$0xff]
        %v308 = vld [vmem:[#allocation5 + $0x158] sm:$0xff]
        %v309 = vld [vmem:[#allocation5 + $0x160] sm:$0xff]
        %v310 = vld [vmem:[#allocation5 + $0x168] sm:$0xff]
        %v311 = vld [vmem:[#allocation5 + $0x170] sm:$0xff]
        %v312 = vld [vmem:[#allocation5 + $0x178] sm:$0xff]
        %v313 = vld [vmem:[#allocation5 + $0x180] sm:$0xff]
        %v314 = vld [vmem:[#allocation5 + $0x188] sm:$0xff]
        %v315 = vld [vmem:[#allocation5 + $0x190] sm:$0xff]
        %v316 = vld [vmem:[#allocation5 + $0x198] sm:$0xff]
        %v317 = vld [vmem:[#allocation5 + $0x1a0] sm:$0xff]
        %v318 = vld [vmem:[#allocation5 + $0x1a8] sm:$0xff]
        %v319 = vld [vmem:[#allocation5 + $0x1b0] sm:$0xff]
        %v320 = vld [vmem:[#allocation5 + $0x1b8] sm:$0xff]
        %v321 = vld [vmem:[#allocation5 + $0x1c0] sm:$0xff]
        %v322 = vld [vmem:[#allocation5 + $0x1c8] sm:$0xff]
        %v323 = vld [vmem:[#allocation5 + $0x1d0] sm:$0xff]
        %v324 = vld [vmem:[#allocation5 + $0x1d8] sm:$0xff]
        %v325 = vld [vmem:[#allocation5 + $0x1e0] sm:$0xff]
        %v326 = vld [vmem:[#allocation5 + $0x1e8] sm:$0xff]
        %v327 = vld [vmem:[#allocation5 + $0x1f0] sm:$0xff]
        %v328 = vld [vmem:[#allocation5 + $0x1f8] sm:$0xff]
        %v329 = vld [vmem:[#allocation5 + $0x200] sm:$0xff]
        %v330 = vld [vmem:[#allocation5 + $0x208] sm:$0xff]
        %v331 = vld [vmem:[#allocation5 + $0x210] sm:$0xff]
        %v332 = vld [vmem:[#allocation5 + $0x218] sm:$0xff]
        %v333 = vld [vmem:[#allocation5 + $0x220] sm:$0xff]
        %v334 = vld [vmem:[#allocation5 + $0x228] sm:$0xff]
        %v335 = vld [vmem:[#allocation5 + $0x230] sm:$0xff]
        %v336 = vld [vmem:[#allocation5 + $0x238] sm:$0xff]
        %v337 = vld [vmem:[#allocation5 + $0x240] sm:$0xff]
        %v338 = vld [vmem:[#allocation5 + $0x248] sm:$0xff]
        %v339 = vld [vmem:[#allocation5 + $0x250] sm:$0xff]
        %v340 = vld [vmem:[#allocation5 + $0x258] sm:$0xff]
        %v341 = vld [vmem:[#allocation5 + $0x260] sm:$0xff]
        %v342 = vld [vmem:[#allocation5 + $0x268] sm:$0xff]
        %v343 = vld [vmem:[#allocation5 + $0x270] sm:$0xff]
        %v344 = vld [vmem:[#allocation5 + $0x278] sm:$0xff]
        %v345 = vld [vmem:[#allocation5 + $0x280] sm:$0xff]
        %v346 = vld [vmem:[#allocation5 + $0x288] sm:$0xff]
        %v347 = vld [vmem:[#allocation5 + $0x290] sm:$0xff]
        %v348 = vld [vmem:[#allocation5 + $0x298] sm:$0xff]
        %v349 = vld [vmem:[#allocation5 + $0x2a0] sm:$0xff]
        %v350 = vld [vmem:[#allocation5 + $0x2a8] sm:$0xff]
        %v351 = vld [vmem:[#allocation5 + $0x2b0] sm:$0xff]
        %v352 = vld [vmem:[#allocation5 + $0x2b8] sm:$0xff]
        %v353 = vld [vmem:[#allocation5 + $0x2c0] sm:$0xff]
        %v354 = vld [vmem:[#allocation5 + $0x2c8] sm:$0xff]
        %v355 = vld [vmem:[#allocation5 + $0x2d0] sm:$0xff]
        %v356 = vld [vmem:[#allocation5 + $0x2d8] sm:$0xff]
        %v357 = vld [vmem:[#allocation5 + $0x2e0] sm:$0xff]
        %v358 = vld [vmem:[#allocation5 + $0x2e8] sm:$0xff]
        %v359 = vld [vmem:[#allocation5 + $0x2f0] sm:$0xff]
        %v360 = vld [vmem:[#allocation5 + $0x2f8] sm:$0xff]
        %v457 = vunpack.c.l.b16 %v265
        %v458 = vunpack.c.h.b16 %v265
        %v459 = vunpack.c.l.b16 %v266
        %v460 = vunpack.c.h.b16 %v266
        %v461 = vunpack.c.l.b16 %v267
        %v462 = vunpack.c.h.b16 %v267
        %v463 = vunpack.c.l.b16 %v268
        %v464 = vunpack.c.h.b16 %v268
        %v465 = vunpack.c.l.b16 %v269
        %v466 = vunpack.c.h.b16 %v269
        %v467 = vunpack.c.l.b16 %v270
        %v468 = vunpack.c.h.b16 %v270
        %v469 = vunpack.c.l.b16 %v271
        %v470 = vunpack.c.h.b16 %v271
        %v471 = vunpack.c.l.b16 %v272
        %v472 = vunpack.c.h.b16 %v272
        %v473 = vunpack.c.l.b16 %v273
        %v474 = vunpack.c.h.b16 %v273
        %v475 = vunpack.c.l.b16 %v274
        %v476 = vunpack.c.h.b16 %v274
        %v477 = vunpack.c.l.b16 %v275
        %v478 = vunpack.c.h.b16 %v275
        %v479 = vunpack.c.l.b16 %v276
        %v480 = vunpack.c.h.b16 %v276
        %v481 = vunpack.c.l.b16 %v277
        %v482 = vunpack.c.h.b16 %v277
        %v483 = vunpack.c.l.b16 %v278
        %v484 = vunpack.c.h.b16 %v278
        %v485 = vunpack.c.l.b16 %v279
        %v486 = vunpack.c.h.b16 %v279
        %v487 = vunpack.c.l.b16 %v280
        %v488 = vunpack.c.h.b16 %v280
        %v489 = vunpack.c.l.b16 %v281
        %v490 = vunpack.c.h.b16 %v281
        %v491 = vunpack.c.l.b16 %v282
        %v492 = vunpack.c.h.b16 %v282
        %v493 = vunpack.c.l.b16 %v283
        %v494 = vunpack.c.h.b16 %v283
        %v495 = vunpack.c.l.b16 %v284
        %v496 = vunpack.c.h.b16 %v284
        %v497 = vunpack.c.l.b16 %v285
        %v498 = vunpack.c.h.b16 %v285
        %v499 = vunpack.c.l.b16 %v286
        %v500 = vunpack.c.h.b16 %v286
        %v501 = vunpack.c.l.b16 %v287
        %v502 = vunpack.c.h.b16 %v287
        %v503 = vunpack.c.l.b16 %v288
        %v504 = vunpack.c.h.b16 %v288
        %v505 = vunpack.c.l.b16 %v289
        %v506 = vunpack.c.h.b16 %v289
        %v507 = vunpack.c.l.b16 %v290
        %v508 = vunpack.c.h.b16 %v290
        %v509 = vunpack.c.l.b16 %v291
        %v510 = vunpack.c.h.b16 %v291
        %v511 = vunpack.c.l.b16 %v292
        %v512 = vunpack.c.h.b16 %v292
        %v513 = vunpack.c.l.b16 %v293
        %v514 = vunpack.c.h.b16 %v293
        %v515 = vunpack.c.l.b16 %v294
        %v516 = vunpack.c.h.b16 %v294
        %v517 = vunpack.c.l.b16 %v295
        %v518 = vunpack.c.h.b16 %v295
        %v519 = vunpack.c.l.b16 %v296
        %v520 = vunpack.c.h.b16 %v296
        %v521 = vunpack.c.l.b16 %v297
        %v522 = vunpack.c.h.b16 %v297
        %v523 = vunpack.c.l.b16 %v298
        %v524 = vunpack.c.h.b16 %v298
        %v525 = vunpack.c.l.b16 %v299
        %v526 = vunpack.c.h.b16 %v299
        %v527 = vunpack.c.l.b16 %v300
        %v528 = vunpack.c.h.b16 %v300
        %v529 = vunpack.c.l.b16 %v301
        %v530 = vunpack.c.h.b16 %v301
        %v531 = vunpack.c.l.b16 %v302
        %v532 = vunpack.c.h.b16 %v302
        %v533 = vunpack.c.l.b16 %v303
        %v534 = vunpack.c.h.b16 %v303
        %v535 = vunpack.c.l.b16 %v304
        %v536 = vunpack.c.h.b16 %v304
        %v537 = vunpack.c.l.b16 %v305
        %v538 = vunpack.c.h.b16 %v305
        %v539 = vunpack.c.l.b16 %v306
        %v540 = vunpack.c.h.b16 %v306
        %v541 = vunpack.c.l.b16 %v307
        %v542 = vunpack.c.h.b16 %v307
        %v543 = vunpack.c.l.b16 %v308
        %v544 = vunpack.c.h.b16 %v308
        %v545 = vunpack.c.l.b16 %v309
        %v546 = vunpack.c.h.b16 %v309
        %v547 = vunpack.c.l.b16 %v310
        %v548 = vunpack.c.h.b16 %v310
        %v549 = vunpack.c.l.b16 %v311
        %v550 = vunpack.c.h.b16 %v311
        %v551 = vunpack.c.l.b16 %v312
        %v552 = vunpack.c.h.b16 %v312
        %v553 = vunpack.c.l.b16 %v313
        %v554 = vunpack.c.h.b16 %v313
        %v555 = vunpack.c.l.b16 %v314
        %v556 = vunpack.c.h.b16 %v314
        %v557 = vunpack.c.l.b16 %v315
        %v558 = vunpack.c.h.b16 %v315
        %v559 = vunpack.c.l.b16 %v316
        %v560 = vunpack.c.h.b16 %v316
        %v561 = vunpack.c.l.b16 %v317
        %v562 = vunpack.c.h.b16 %v317
        %v563 = vunpack.c.l.b16 %v318
        %v564 = vunpack.c.h.b16 %v318
        %v565 = vunpack.c.l.b16 %v319
        %v566 = vunpack.c.h.b16 %v319
        %v567 = vunpack.c.l.b16 %v320
        %v568 = vunpack.c.h.b16 %v320
        %v569 = vunpack.c.l.b16 %v321
        %v570 = vunpack.c.h.b16 %v321
        %v571 = vunpack.c.l.b16 %v322
        %v572 = vunpack.c.h.b16 %v322
        %v573 = vunpack.c.l.b16 %v323
        %v574 = vunpack.c.h.b16 %v323
        %v575 = vunpack.c.l.b16 %v324
        %v576 = vunpack.c.h.b16 %v324
        %v577 = vunpack.c.l.b16 %v325
        %v578 = vunpack.c.h.b16 %v325
        %v579 = vunpack.c.l.b16 %v326
        %v580 = vunpack.c.h.b16 %v326
        %v581 = vunpack.c.l.b16 %v327
        %v582 = vunpack.c.h.b16 %v327
        %v583 = vunpack.c.l.b16 %v328
        %v584 = vunpack.c.h.b16 %v328
        %v585 = vunpack.c.l.b16 %v329
        %v586 = vunpack.c.h.b16 %v329
        %v587 = vunpack.c.l.b16 %v330
        %v588 = vunpack.c.h.b16 %v330
        %v589 = vunpack.c.l.b16 %v331
        %v590 = vunpack.c.h.b16 %v331
        %v591 = vunpack.c.l.b16 %v332
        %v592 = vunpack.c.h.b16 %v332
        %v593 = vunpack.c.l.b16 %v333
        %v594 = vunpack.c.h.b16 %v333
        %v595 = vunpack.c.l.b16 %v334
        %v596 = vunpack.c.h.b16 %v334
        %v597 = vunpack.c.l.b16 %v335
        %v598 = vunpack.c.h.b16 %v335
        %v599 = vunpack.c.l.b16 %v336
        %v600 = vunpack.c.h.b16 %v336
        %v601 = vunpack.c.l.b16 %v337
        %v602 = vunpack.c.h.b16 %v337
        %v603 = vunpack.c.l.b16 %v338
        %v604 = vunpack.c.h.b16 %v338
        %v605 = vunpack.c.l.b16 %v339
        %v606 = vunpack.c.h.b16 %v339
        %v607 = vunpack.c.l.b16 %v340
        %v608 = vunpack.c.h.b16 %v340
        %v609 = vunpack.c.l.b16 %v341
        %v610 = vunpack.c.h.b16 %v341
        %v611 = vunpack.c.l.b16 %v342
        %v612 = vunpack.c.h.b16 %v342
        %v613 = vunpack.c.l.b16 %v343
        %v614 = vunpack.c.h.b16 %v343
        %v615 = vunpack.c.l.b16 %v344
        %v616 = vunpack.c.h.b16 %v344
        %v617 = vunpack.c.l.b16 %v345
        %v618 = vunpack.c.h.b16 %v345
        %v619 = vunpack.c.l.b16 %v346
        %v620 = vunpack.c.h.b16 %v346
        %v621 = vunpack.c.l.b16 %v347
        %v622 = vunpack.c.h.b16 %v347
        %v623 = vunpack.c.l.b16 %v348
        %v624 = vunpack.c.h.b16 %v348
        %v625 = vunpack.c.l.b16 %v349
        %v626 = vunpack.c.h.b16 %v349
        %v627 = vunpack.c.l.b16 %v350
        %v628 = vunpack.c.h.b16 %v350
        %v629 = vunpack.c.l.b16 %v351
        %v630 = vunpack.c.h.b16 %v351
        %v631 = vunpack.c.l.b16 %v352
        %v632 = vunpack.c.h.b16 %v352
        %v633 = vunpack.c.l.b16 %v353
        %v634 = vunpack.c.h.b16 %v353
        %v635 = vunpack.c.l.b16 %v354
        %v636 = vunpack.c.h.b16 %v354
        %v637 = vunpack.c.l.b16 %v355
        %v638 = vunpack.c.h.b16 %v355
        %v639 = vunpack.c.l.b16 %v356
        %v640 = vunpack.c.h.b16 %v356
        %v641 = vunpack.c.l.b16 %v357
        %v642 = vunpack.c.h.b16 %v357
        %v643 = vunpack.c.l.b16 %v358
        %v644 = vunpack.c.h.b16 %v358
        %v645 = vunpack.c.l.b16 %v359
        %v646 = vunpack.c.h.b16 %v359
        %v647 = vunpack.c.l.b16 %v360
        %v648 = vunpack.c.h.b16 %v360
        %v649 = vpack.c.b16 %v463, %v457
        %v650 = vpack.c.b16 %v464, %v458
        %v651 = vpack.c.b16 %v465, %v459
        %v652 = vpack.c.b16 %v466, %v460
        %v653 = vpack.c.b16 %v467, %v461
        %v654 = vpack.c.b16 %v468, %v462
        %v655 = vpack.c.b16 %v475, %v469
        %v656 = vpack.c.b16 %v476, %v470
        %v657 = vpack.c.b16 %v477, %v471
        %v658 = vpack.c.b16 %v478, %v472
        %v659 = vpack.c.b16 %v479, %v473
        %v660 = vpack.c.b16 %v480, %v474
        %v661 = vpack.c.b16 %v487, %v481
        %v662 = vpack.c.b16 %v488, %v482
        %v663 = vpack.c.b16 %v489, %v483
        %v664 = vpack.c.b16 %v490, %v484
        %v665 = vpack.c.b16 %v491, %v485
        %v666 = vpack.c.b16 %v492, %v486
        %v667 = vpack.c.b16 %v499, %v493
        %v668 = vpack.c.b16 %v500, %v494
        %v669 = vpack.c.b16 %v501, %v495
        %v670 = vpack.c.b16 %v502, %v496
        %v671 = vpack.c.b16 %v503, %v497
        %v672 = vpack.c.b16 %v504, %v498
        %v673 = vpack.c.b16 %v511, %v505
        %v674 = vpack.c.b16 %v512, %v506
        %v675 = vpack.c.b16 %v513, %v507
        %v676 = vpack.c.b16 %v514, %v508
        %v677 = vpack.c.b16 %v515, %v509
        %v678 = vpack.c.b16 %v516, %v510
        %v679 = vpack.c.b16 %v523, %v517
        %v680 = vpack.c.b16 %v524, %v518
        %v681 = vpack.c.b16 %v525, %v519
        %v682 = vpack.c.b16 %v526, %v520
        %v683 = vpack.c.b16 %v527, %v521
        %v684 = vpack.c.b16 %v528, %v522
        %v685 = vpack.c.b16 %v535, %v529
        %v686 = vpack.c.b16 %v536, %v530
        %v687 = vpack.c.b16 %v537, %v531
        %v688 = vpack.c.b16 %v538, %v532
        %v689 = vpack.c.b16 %v539, %v533
        %v690 = vpack.c.b16 %v540, %v534
        %v691 = vpack.c.b16 %v547, %v541
        %v692 = vpack.c.b16 %v548, %v542
        %v693 = vpack.c.b16 %v549, %v543
        %v694 = vpack.c.b16 %v550, %v544
        %v695 = vpack.c.b16 %v551, %v545
        %v696 = vpack.c.b16 %v552, %v546
        %v697 = vpack.c.b16 %v559, %v553
        %v698 = vpack.c.b16 %v560, %v554
        %v699 = vpack.c.b16 %v561, %v555
        %v700 = vpack.c.b16 %v562, %v556
        %v701 = vpack.c.b16 %v563, %v557
        %v702 = vpack.c.b16 %v564, %v558
        %v703 = vpack.c.b16 %v571, %v565
        %v704 = vpack.c.b16 %v572, %v566
        %v705 = vpack.c.b16 %v573, %v567
        %v706 = vpack.c.b16 %v574, %v568
        %v707 = vpack.c.b16 %v575, %v569
        %v708 = vpack.c.b16 %v576, %v570
        %v709 = vpack.c.b16 %v583, %v577
        %v710 = vpack.c.b16 %v584, %v578
        %v711 = vpack.c.b16 %v585, %v579
        %v712 = vpack.c.b16 %v586, %v580
        %v713 = vpack.c.b16 %v587, %v581
        %v714 = vpack.c.b16 %v588, %v582
        %v715 = vpack.c.b16 %v595, %v589
        %v716 = vpack.c.b16 %v596, %v590
        %v717 = vpack.c.b16 %v597, %v591
        %v718 = vpack.c.b16 %v598, %v592
        %v719 = vpack.c.b16 %v599, %v593
        %v720 = vpack.c.b16 %v600, %v594
        %v721 = vpack.c.b16 %v607, %v601
        %v722 = vpack.c.b16 %v608, %v602
        %v723 = vpack.c.b16 %v609, %v603
        %v724 = vpack.c.b16 %v610, %v604
        %v725 = vpack.c.b16 %v611, %v605
        %v726 = vpack.c.b16 %v612, %v606
        %v727 = vpack.c.b16 %v619, %v613
        %v728 = vpack.c.b16 %v620, %v614
        %v729 = vpack.c.b16 %v621, %v615
        %v730 = vpack.c.b16 %v622, %v616
        %v731 = vpack.c.b16 %v623, %v617
        %v732 = vpack.c.b16 %v624, %v618
        %v733 = vpack.c.b16 %v631, %v625
        %v734 = vpack.c.b16 %v632, %v626
        %v735 = vpack.c.b16 %v633, %v627
        %v736 = vpack.c.b16 %v634, %v628
        %v737 = vpack.c.b16 %v635, %v629
        %v738 = vpack.c.b16 %v636, %v630
        %v739 = vpack.c.b16 %v643, %v637
        %v740 = vpack.c.b16 %v644, %v638
        %v741 = vpack.c.b16 %v645, %v639
        %v742 = vpack.c.b16 %v646, %v640
        %v743 = vpack.c.b16 %v647, %v641
        %v744 = vpack.c.b16 %v648, %v642
        %841 = vmatprep.subr.bf16.mxu0 %v650
        %842 = vmatpush1.bf16.msra.mxu0 %v649
        %843 = vmatprep.subr.bf16.mxu0 %v656
        %844 = vmatpush1.bf16.msra.mxu0 %v655
        %845 = vmatprep.subr.bf16.mxu0 %v662
        %846 = vmatpush1.bf16.msra.mxu0 %v661
        %847 = vmatprep.subr.bf16.mxu0 %v668
        %848 = vmatpush1.bf16.msra.mxu0 %v667
        %849 = vmatprep.subr.bf16.mxu0 %v674
        %850 = vmatpush1.bf16.msra.mxu0 %v673
        %851 = vmatprep.subr.bf16.mxu0 %v680
        %852 = vmatpush1.bf16.msra.mxu0 %v679
        %853 = vmatprep.subr.bf16.mxu0 %v686
        %854 = vmatpush1.bf16.msra.mxu0 %v685
        %855 = vmatprep.subr.bf16.mxu0 %v692
        %856 = vmatpush1.bf16.msra.mxu0 %v691
        %857 = vmatprep.subr.bf16.mxu0 %v698
        %858 = vmatpush1.bf16.msra.mxu0 %v697
        %859 = vmatprep.subr.bf16.mxu0 %v704
        %860 = vmatpush1.bf16.msra.mxu0 %v703
        %861 = vmatprep.subr.bf16.mxu0 %v710
        %862 = vmatpush1.bf16.msra.mxu0 %v709
        %863 = vmatprep.subr.bf16.mxu0 %v716
        %864 = vmatpush1.bf16.msra.mxu0 %v715
        %865 = vmatprep.subr.bf16.mxu0 %v722
        %866 = vmatpush1.bf16.msra.mxu0 %v721
        %867 = vmatprep.subr.bf16.mxu0 %v728
        %868 = vmatpush1.bf16.msra.mxu0 %v727
        %869 = vmatprep.subr.bf16.mxu0 %v734
        %870 = vmatpush1.bf16.msra.mxu0 %v733
        %871 = vmatprep.subr.bf16.mxu0 %v740
        %872 = vmatpush1.bf16.msra.mxu0 %v739
        %873 = vmatprep.mubr.bf16.mxu0 %v250
        %874 = vmatmul.mubr.bf16.gmra.mrb[0].mxu0 %v249
        %v875 = vpop.f32.mrb[0].mxu0
        %v876 = vadd.f32 0.0, %v875
        %v877 = vpop.f32.mrb[0].mxu0
        %v878 = vadd.f32 0.0, %v877
        %v879 = vpop.f32.mrb[0].mxu0
        %v880 = vadd.f32 0.0, %v879
        %v881 = vpop.f32.mrb[0].mxu0
        %v882 = vadd.f32 0.0, %v881
        %883 = vmatprep.mubr.bf16.mxu0 %v252
        %884 = vmatmul.mubr.bf16.gmra.mrb[0].mxu0 %v251
        %v885 = vpop.f32.mrb[0].mxu0
        %v886 = vadd.f32 0.0, %v885
        %v887 = vpop.f32.mrb[0].mxu0
        %v888 = vadd.f32 0.0, %v887
        %v889 = vpop.f32.mrb[0].mxu0
        %v890 = vadd.f32 0.0, %v889
        %v891 = vpop.f32.mrb[0].mxu0
        %v892 = vadd.f32 0.0, %v891
        %893 = vmatprep.mubr.bf16.mxu0 %v254
        %894 = vmatmul.mubr.bf16.gmra.mrb[0].mxu0 %v253
        %v895 = vpop.f32.mrb[0].mxu0
        %v896 = vadd.f32 0.0, %v895
        %v897 = vpop.f32.mrb[0].mxu0
        %v898 = vadd.f32 0.0, %v897
        %v899 = vpop.f32.mrb[0].mxu0
        %v900 = vadd.f32 0.0, %v899
        %v901 = vpop.f32.mrb[0].mxu0
        %v902 = vadd.f32 0.0, %v901
        %903 = vmatprep.mubr.bf16.mxu0 %v256
        %904 = vmatmul.mubr.bf16.gmra.mrb[0].mxu0 %v255
        %v905 = vpop.f32.mrb[0].mxu0
        %v906 = vadd.f32 0.0, %v905
        %v907 = vpop.f32.mrb[0].mxu0
        %v908 = vadd.f32 0.0, %v907
        %v909 = vpop.f32.mrb[0].mxu0
        %v910 = vadd.f32 0.0, %v909
        %v911 = vpop.f32.mrb[0].mxu0
        %v912 = vadd.f32 0.0, %v911
        %913 = vmatprep.mubr.bf16.mxu0 %v258
        %914 = vmatmul.mubr.bf16.gmra.mrb[0].mxu0 %v257
        %v915 = vpop.f32.mrb[0].mxu0
        %v916 = vadd.f32 0.0, %v915
        %v917 = vpop.f32.mrb[0].mxu0
        %v918 = vadd.f32 0.0, %v917
        %v919 = vpop.f32.mrb[0].mxu0
        %v920 = vadd.f32 0.0, %v919
        %v921 = vpop.f32.mrb[0].mxu0
        %v922 = vadd.f32 0.0, %v921
        %923 = vmatprep.mubr.bf16.mxu0 %v260
        %924 = vmatmul.mubr.bf16.gmra.mrb[0].mxu0 %v259
        %v925 = vpop.f32.mrb[0].mxu0
        %v926 = vadd.f32 0.0, %v925
        %v927 = vpop.f32.mrb[0].mxu0
        %v928 = vadd.f32 0.0, %v927
        %v929 = vpop.f32.mrb[0].mxu0
        %v930 = vadd.f32 0.0, %v929
        %v931 = vpop.f32.mrb[0].mxu0
        %v932 = vadd.f32 0.0, %v931
        %933 = vmatprep.mubr.bf16.mxu0 %v262
        %934 = vmatmul.mubr.bf16.gmra.mrb[0].mxu0 %v261
        %v935 = vpop.f32.mrb[0].mxu0
        %v936 = vadd.f32 0.0, %v935
        %v937 = vpop.f32.mrb[0].mxu0
        %v938 = vadd.f32 0.0, %v937
        %v939 = vpop.f32.mrb[0].mxu0
        %v940 = vadd.f32 0.0, %v939
        %v941 = vpop.f32.mrb[0].mxu0
        %v942 = vadd.f32 0.0, %v941
        %943 = vmatprep.mubr.bf16.mxu0 %v264
        %944 = vmatmul.mubr.bf16.gmra.mrb[0].mxu0 %v263
        %v945 = vpop.f32.mrb[0].mxu0
        %v946 = vadd.f32 0.0, %v945
        %v947 = vpop.f32.mrb[0].mxu0
        %v948 = vadd.f32 0.0, %v947
        %v949 = vpop.f32.mrb[0].mxu0
        %v950 = vadd.f32 0.0, %v949
        %v951 = vpop.f32.mrb[0].mxu0
        %v952 = vadd.f32 0.0, %v951
        %953 = vdwg.mxu0
        %954 = vmatprep.subr.bf16.mxu0 %v652
        %955 = vmatpush1.bf16.msra.mxu0 %v651
        %956 = vmatprep.subr.bf16.mxu0 %v658
        %957 = vmatpush1.bf16.msra.mxu0 %v657
        %958 = vmatprep.subr.bf16.mxu0 %v664
        %959 = vmatpush1.bf16.msra.mxu0 %v663
        %960 = vmatprep.subr.bf16.mxu0 %v670
        %961 = vmatpush1.bf16.msra.mxu0 %v669
        %962 = vmatprep.subr.bf16.mxu0 %v676
        %963 = vmatpush1.bf16.msra.mxu0 %v675
        %964 = vmatprep.subr.bf16.mxu0 %v682
        %965 = vmatpush1.bf16.msra.mxu0 %v681
        %966 = vmatprep.subr.bf16.mxu0 %v688
        %967 = vmatpush1.bf16.msra.mxu0 %v687
        %968 = vmatprep.subr.bf16.mxu0 %v694
        %969 = vmatpush1.bf16.msra.mxu0 %v693
        %970 = vmatprep.subr.bf16.mxu0 %v700
        %971 = vmatpush1.bf16.msra.mxu0 %v699
        %972 = vmatprep.subr.bf16.mxu0 %v706
        %973 = vmatpush1.bf16.msra.mxu0 %v705
        %974 = vmatprep.subr.bf16.mxu0 %v712
        %975 = vmatpush1.bf16.msra.mxu0 %v711
        %976 = vmatprep.subr.bf16.mxu0 %v718
        %977 = vmatpush1.bf16.msra.mxu0 %v717
        %978 = vmatprep.subr.bf16.mxu0 %v724
        %979 = vmatpush1.bf16.msra.mxu0 %v723
        %980 = vmatprep.subr.bf16.mxu0 %v730
        %981 = vmatpush1.bf16.msra.mxu0 %v729
        %982 = vmatprep.subr.bf16.mxu0 %v736
        %983 = vmatpush1.bf16.msra.mxu0 %v735
        %984 = vmatprep.subr.bf16.mxu0 %v742
        %985 = vmatpush1.bf16.msra.mxu0 %v741
        %986 = vmatprep.mubr.bf16.mxu0 %v250
        %987 = vmatmul.mubr.bf16.gmra.mrb[0].mxu0 %v249
        %v988 = vpop.f32.mrb[0].mxu0
        %v989 = vadd.f32 0.0, %v988
        %v990 = vpop.f32.mrb[0].mxu0
        %v991 = vadd.f32 0.0, %v990
        %v992 = vpop.f32.mrb[0].mxu0
        %v993 = vadd.f32 0.0, %v992
        %v994 = vpop.f32.mrb[0].mxu0
        %v995 = vadd.f32 0.0, %v994
        %996 = vmatprep.mubr.bf16.mxu0 %v252
        %997 = vmatmul.mubr.bf16.gmra.mrb[0].mxu0 %v251
        %v998 = vpop.f32.mrb[0].mxu0
        %v999 = vadd.f32 0.0, %v998
        %v1000 = vpop.f32.mrb[0].mxu0
        %v1001 = vadd.f32 0.0, %v1000
        %v1002 = vpop.f32.mrb[0].mxu0
        %v1003 = vadd.f32 0.0, %v1002
        %v1004 = vpop.f32.mrb[0].mxu0
        %v1005 = vadd.f32 0.0, %v1004
        %1006 = vmatprep.mubr.bf16.mxu0 %v254
        %1007 = vmatmul.mubr.bf16.gmra.mrb[0].mxu0 %v253
        %v1008 = vpop.f32.mrb[0].mxu0
        %v1009 = vadd.f32 0.0, %v1008
        %v1010 = vpop.f32.mrb[0].mxu0
        %v1011 = vadd.f32 0.0, %v1010
        %v1012 = vpop.f32.mrb[0].mxu0
        %v1013 = vadd.f32 0.0, %v1012
        %v1014 = vpop.f32.mrb[0].mxu0
        %v1015 = vadd.f32 0.0, %v1014
        %1016 = vmatprep.mubr.bf16.mxu0 %v256
        %1017 = vmatmul.mubr.bf16.gmra.mrb[0].mxu0 %v255
        %v1018 = vpop.f32.mrb[0].mxu0
        %v1019 = vadd.f32 0.0, %v1018
        %v1020 = vpop.f32.mrb[0].mxu0
        %v1021 = vadd.f32 0.0, %v1020
        %v1022 = vpop.f32.mrb[0].mxu0
        %v1023 = vadd.f32 0.0, %v1022
        %v1024 = vpop.f32.mrb[0].mxu0
        %v1025 = vadd.f32 0.0, %v1024
        %1026 = vmatprep.mubr.bf16.mxu0 %v258
        %1027 = vmatmul.mubr.bf16.gmra.mrb[0].mxu0 %v257
        %v1028 = vpop.f32.mrb[0].mxu0
        %v1029 = vadd.f32 0.0, %v1028
        %v1030 = vpop.f32.mrb[0].mxu0
        %v1031 = vadd.f32 0.0, %v1030
        %v1032 = vpop.f32.mrb[0].mxu0
        %v1033 = vadd.f32 0.0, %v1032
        %v1034 = vpop.f32.mrb[0].mxu0
        %v1035 = vadd.f32 0.0, %v1034
        %1036 = vmatprep.mubr.bf16.mxu0 %v260
        %1037 = vmatmul.mubr.bf16.gmra.mrb[0].mxu0 %v259
        %v1038 = vpop.f32.mrb[0].mxu0
        %v1039 = vadd.f32 0.0, %v1038
        %v1040 = vpop.f32.mrb[0].mxu0
        %v1041 = vadd.f32 0.0, %v1040
        %v1042 = vpop.f32.mrb[0].mxu0
        %v1043 = vadd.f32 0.0, %v1042
        %v1044 = vpop.f32.mrb[0].mxu0
        %v1045 = vadd.f32 0.0, %v1044
        %1046 = vmatprep.mubr.bf16.mxu0 %v262
        %1047 = vmatmul.mubr.bf16.gmra.mrb[0].mxu0 %v261
        %v1048 = vpop.f32.mrb[0].mxu0
        %v1049 = vadd.f32 0.0, %v1048
        %v1050 = vpop.f32.mrb[0].mxu0
        %v1051 = vadd.f32 0.0, %v1050
        %v1052 = vpop.f32.mrb[0].mxu0
        %v1053 = vadd.f32 0.0, %v1052
        %v1054 = vpop.f32.mrb[0].mxu0
        %v1055 = vadd.f32 0.0, %v1054
        %1056 = vmatprep.mubr.bf16.mxu0 %v264
        %1057 = vmatmul.mubr.bf16.gmra.mrb[0].mxu0 %v263
        %v1058 = vpop.f32.mrb[0].mxu0
        %v1059 = vadd.f32 0.0, %v1058
        %v1060 = vpop.f32.mrb[0].mxu0
        %v1061 = vadd.f32 0.0, %v1060
        %v1062 = vpop.f32.mrb[0].mxu0
        %v1063 = vadd.f32 0.0, %v1062
        %v1064 = vpop.f32.mrb[0].mxu0
        %v1065 = vadd.f32 0.0, %v1064
        %1066 = vdwg.mxu0
        %1067 = vmatprep.subr.bf16.mxu0 %v654
        %1068 = vmatpush1.bf16.msra.mxu0 %v653
        %1069 = vmatprep.subr.bf16.mxu0 %v660
        %1070 = vmatpush1.bf16.msra.mxu0 %v659
        %1071 = vmatprep.subr.bf16.mxu0 %v666
        %1072 = vmatpush1.bf16.msra.mxu0 %v665
        %1073 = vmatprep.subr.bf16.mxu0 %v672
        %1074 = vmatpush1.bf16.msra.mxu0 %v671
        %1075 = vmatprep.subr.bf16.mxu0 %v678
        %1076 = vmatpush1.bf16.msra.mxu0 %v677
        %1077 = vmatprep.subr.bf16.mxu0 %v684
        %1078 = vmatpush1.bf16.msra.mxu0 %v683
        %1079 = vmatprep.subr.bf16.mxu0 %v690
        %1080 = vmatpush1.bf16.msra.mxu0 %v689
        %1081 = vmatprep.subr.bf16.mxu0 %v696
        %1082 = vmatpush1.bf16.msra.mxu0 %v695
        %1083 = vmatprep.subr.bf16.mxu0 %v702
        %1084 = vmatpush1.bf16.msra.mxu0 %v701
        %1085 = vmatprep.subr.bf16.mxu0 %v708
        %1086 = vmatpush1.bf16.msra.mxu0 %v707
        %1087 = vmatprep.subr.bf16.mxu0 %v714
        %1088 = vmatpush1.bf16.msra.mxu0 %v713
        %1089 = vmatprep.subr.bf16.mxu0 %v720
        %1090 = vmatpush1.bf16.msra.mxu0 %v719
        %1091 = vmatprep.subr.bf16.mxu0 %v726
        %1092 = vmatpush1.bf16.msra.mxu0 %v725
        %1093 = vmatprep.subr.bf16.mxu0 %v732
        %1094 = vmatpush1.bf16.msra.mxu0 %v731
        %1095 = vmatprep.subr.bf16.mxu0 %v738
        %1096 = vmatpush1.bf16.msra.mxu0 %v737
        %1097 = vmatprep.subr.bf16.mxu0 %v744
        %1098 = vmatpush1.bf16.msra.mxu0 %v743
        %1099 = vmatprep.mubr.bf16.mxu0 %v250
        %1100 = vmatmul.mubr.bf16.gmra.mrb[0].mxu0 %v249
        %v1101 = vpop.f32.mrb[0].mxu0
        %v1102 = vadd.f32 0.0, %v1101
        %v1103 = vpop.f32.mrb[0].mxu0
        %v1104 = vadd.f32 0.0, %v1103
        %v1105 = vpop.f32.mrb[0].mxu0
        %v1106 = vadd.f32 0.0, %v1105
        %v1107 = vpop.f32.mrb[0].mxu0
        %v1108 = vadd.f32 0.0, %v1107
        %1109 = vmatprep.mubr.bf16.mxu0 %v252
        %1110 = vmatmul.mubr.bf16.gmra.mrb[0].mxu0 %v251
        %v1111 = vpop.f32.mrb[0].mxu0
        %v1112 = vadd.f32 0.0, %v1111
        %v1113 = vpop.f32.mrb[0].mxu0
        %v1114 = vadd.f32 0.0, %v1113
        %v1115 = vpop.f32.mrb[0].mxu0
        %v1116 = vadd.f32 0.0, %v1115
        %v1117 = vpop.f32.mrb[0].mxu0
        %v1118 = vadd.f32 0.0, %v1117
        %1119 = vmatprep.mubr.bf16.mxu0 %v254
        %1120 = vmatmul.mubr.bf16.gmra.mrb[0].mxu0 %v253
        %v1121 = vpop.f32.mrb[0].mxu0
        %v1122 = vadd.f32 0.0, %v1121
        %v1123 = vpop.f32.mrb[0].mxu0
        %v1124 = vadd.f32 0.0, %v1123
        %v1125 = vpop.f32.mrb[0].mxu0
        %v1126 = vadd.f32 0.0, %v1125
        %v1127 = vpop.f32.mrb[0].mxu0
        %v1128 = vadd.f32 0.0, %v1127
        %1129 = vmatprep.mubr.bf16.mxu0 %v256
        %1130 = vmatmul.mubr.bf16.gmra.mrb[0].mxu0 %v255
        %v1131 = vpop.f32.mrb[0].mxu0
        %v1132 = vadd.f32 0.0, %v1131
        %v1133 = vpop.f32.mrb[0].mxu0
        %v1134 = vadd.f32 0.0, %v1133
        %v1135 = vpop.f32.mrb[0].mxu0
        %v1136 = vadd.f32 0.0, %v1135
        %v1137 = vpop.f32.mrb[0].mxu0
        %v1138 = vadd.f32 0.0, %v1137
        %1139 = vmatprep.mubr.bf16.mxu0 %v258
        %1140 = vmatmul.mubr.bf16.gmra.mrb[0].mxu0 %v257
        %v1141 = vpop.f32.mrb[0].mxu0
        %v1142 = vadd.f32 0.0, %v1141
        %v1143 = vpop.f32.mrb[0].mxu0
        %v1144 = vadd.f32 0.0, %v1143
        %v1145 = vpop.f32.mrb[0].mxu0
        %v1146 = vadd.f32 0.0, %v1145
        %v1147 = vpop.f32.mrb[0].mxu0
        %v1148 = vadd.f32 0.0, %v1147
        %1149 = vmatprep.mubr.bf16.mxu0 %v260
        %1150 = vmatmul.mubr.bf16.gmra.mrb[0].mxu0 %v259
        %v1151 = vpop.f32.mrb[0].mxu0
        %v1152 = vadd.f32 0.0, %v1151
        %v1153 = vpop.f32.mrb[0].mxu0
        %v1154 = vadd.f32 0.0, %v1153
        %v1155 = vpop.f32.mrb[0].mxu0
        %v1156 = vadd.f32 0.0, %v1155
        %v1157 = vpop.f32.mrb[0].mxu0
        %v1158 = vadd.f32 0.0, %v1157
        %1159 = vmatprep.mubr.bf16.mxu0 %v262
        %1160 = vmatmul.mubr.bf16.gmra.mrb[0].mxu0 %v261
        %v1161 = vpop.f32.mrb[0].mxu0
        %v1162 = vadd.f32 0.0, %v1161
        %v1163 = vpop.f32.mrb[0].mxu0
        %v1164 = vadd.f32 0.0, %v1163
        %v1165 = vpop.f32.mrb[0].mxu0
        %v1166 = vadd.f32 0.0, %v1165
        %v1167 = vpop.f32.mrb[0].mxu0
        %v1168 = vadd.f32 0.0, %v1167
        %1169 = vmatprep.mubr.bf16.mxu0 %v264
        %1170 = vmatmul.mubr.bf16.gmra.mrb[0].mxu0 %v263
        %v1171 = vpop.f32.mrb[0].mxu0
        %v1172 = vadd.f32 0.0, %v1171
        %v1173 = vpop.f32.mrb[0].mxu0
        %v1174 = vadd.f32 0.0, %v1173
        %v1175 = vpop.f32.mrb[0].mxu0
        %v1176 = vadd.f32 0.0, %v1175
        %v1177 = vpop.f32.mrb[0].mxu0
        %v1178 = vadd.f32 0.0, %v1177
        %1179 = vdwg.mxu0
        %v1180 = vpack.c.bf16 %v880, %v876
        %v1181 = vpack.c.bf16 %v882, %v878
        %v1182 = vpack.c.bf16 %v993, %v989
        %v1183 = vpack.c.bf16 %v995, %v991
        %v1184 = vpack.c.bf16 %v1106, %v1102
        %v1185 = vpack.c.bf16 %v1108, %v1104
        %v1186 = vpack.c.bf16 %v890, %v886
        %v1187 = vpack.c.bf16 %v892, %v888
        %v1188 = vpack.c.bf16 %v1003, %v999
        %v1189 = vpack.c.bf16 %v1005, %v1001
        %v1190 = vpack.c.bf16 %v1116, %v1112
        %v1191 = vpack.c.bf16 %v1118, %v1114
        %v1192 = vpack.c.bf16 %v900, %v896
        %v1193 = vpack.c.bf16 %v902, %v898
        %v1194 = vpack.c.bf16 %v1013, %v1009
        %v1195 = vpack.c.bf16 %v1015, %v1011
        %v1196 = vpack.c.bf16 %v1126, %v1122
        %v1197 = vpack.c.bf16 %v1128, %v1124
        %v1198 = vpack.c.bf16 %v910, %v906
        %v1199 = vpack.c.bf16 %v912, %v908
        %v1200 = vpack.c.bf16 %v1023, %v1019
        %v1201 = vpack.c.bf16 %v1025, %v1021
        %v1202 = vpack.c.bf16 %v1136, %v1132
        %v1203 = vpack.c.bf16 %v1138, %v1134
        %v1204 = vpack.c.bf16 %v920, %v916
        %v1205 = vpack.c.bf16 %v922, %v918
        %v1206 = vpack.c.bf16 %v1033, %v1029
        %v1207 = vpack.c.bf16 %v1035, %v1031
        %v1208 = vpack.c.bf16 %v1146, %v1142
        %v1209 = vpack.c.bf16 %v1148, %v1144
        %v1210 = vpack.c.bf16 %v930, %v926
        %v1211 = vpack.c.bf16 %v932, %v928
        %v1212 = vpack.c.bf16 %v1043, %v1039
        %v1213 = vpack.c.bf16 %v1045, %v1041
        %v1214 = vpack.c.bf16 %v1156, %v1152
        %v1215 = vpack.c.bf16 %v1158, %v1154
        %v1216 = vpack.c.bf16 %v940, %v936
        %v1217 = vpack.c.bf16 %v942, %v938
        %v1218 = vpack.c.bf16 %v1053, %v1049
        %v1219 = vpack.c.bf16 %v1055, %v1051
        %v1220 = vpack.c.bf16 %v1166, %v1162
        %v1221 = vpack.c.bf16 %v1168, %v1164
        %v1222 = vpack.c.bf16 %v950, %v946
        %v1223 = vpack.c.bf16 %v952, %v948
        %v1224 = vpack.c.bf16 %v1063, %v1059
        %v1225 = vpack.c.bf16 %v1065, %v1061
        %v1226 = vpack.c.bf16 %v1176, %v1172
        %v1227 = vpack.c.bf16 %v1178, %v1174
        %v1276 = vunpack.c.l.b16 %v1180
        %v1277 = vunpack.c.l.b16 %v1181
        %v1278 = vunpack.c.l.b16 %v1182
        %v1279 = vunpack.c.l.b16 %v1183
        %v1280 = vunpack.c.l.b16 %v1184
        %v1281 = vunpack.c.l.b16 %v1185
        %v1282 = vunpack.c.h.b16 %v1180
        %v1283 = vunpack.c.h.b16 %v1181
        %v1284 = vunpack.c.h.b16 %v1182
        %v1285 = vunpack.c.h.b16 %v1183
        %v1286 = vunpack.c.h.b16 %v1184
        %v1287 = vunpack.c.h.b16 %v1185
        %v1288 = vunpack.c.l.b16 %v1186
        %v1289 = vunpack.c.l.b16 %v1187
        %v1290 = vunpack.c.l.b16 %v1188
        %v1291 = vunpack.c.l.b16 %v1189
        %v1292 = vunpack.c.l.b16 %v1190
        %v1293 = vunpack.c.l.b16 %v1191
        %v1294 = vunpack.c.h.b16 %v1186
        %v1295 = vunpack.c.h.b16 %v1187
        %v1296 = vunpack.c.h.b16 %v1188
        %v1297 = vunpack.c.h.b16 %v1189
        %v1298 = vunpack.c.h.b16 %v1190
        %v1299 = vunpack.c.h.b16 %v1191
        %v1300 = vunpack.c.l.b16 %v1192
        %v1301 = vunpack.c.l.b16 %v1193
        %v1302 = vunpack.c.l.b16 %v1194
        %v1303 = vunpack.c.l.b16 %v1195
        %v1304 = vunpack.c.l.b16 %v1196
        %v1305 = vunpack.c.l.b16 %v1197
        %v1306 = vunpack.c.h.b16 %v1192
        %v1307 = vunpack.c.h.b16 %v1193
        %v1308 = vunpack.c.h.b16 %v1194
        %v1309 = vunpack.c.h.b16 %v1195
        %v1310 = vunpack.c.h.b16 %v1196
        %v1311 = vunpack.c.h.b16 %v1197
        %v1312 = vunpack.c.l.b16 %v1198
        %v1313 = vunpack.c.l.b16 %v1199
        %v1314 = vunpack.c.l.b16 %v1200
        %v1315 = vunpack.c.l.b16 %v1201
        %v1316 = vunpack.c.l.b16 %v1202
        %v1317 = vunpack.c.l.b16 %v1203
        %v1318 = vunpack.c.h.b16 %v1198
        %v1319 = vunpack.c.h.b16 %v1199
        %v1320 = vunpack.c.h.b16 %v1200
        %v1321 = vunpack.c.h.b16 %v1201
        %v1322 = vunpack.c.h.b16 %v1202
        %v1323 = vunpack.c.h.b16 %v1203
        %v1324 = vunpack.c.l.b16 %v1204
        %v1325 = vunpack.c.l.b16 %v1205
        %v1326 = vunpack.c.l.b16 %v1206
        %v1327 = vunpack.c.l.b16 %v1207
        %v1328 = vunpack.c.l.b16 %v1208
        %v1329 = vunpack.c.l.b16 %v1209
        %v1330 = vunpack.c.h.b16 %v1204
        %v1331 = vunpack.c.h.b16 %v1205
        %v1332 = vunpack.c.h.b16 %v1206
        %v1333 = vunpack.c.h.b16 %v1207
        %v1334 = vunpack.c.h.b16 %v1208
        %v1335 = vunpack.c.h.b16 %v1209
        %v1336 = vunpack.c.l.b16 %v1210
        %v1337 = vunpack.c.l.b16 %v1211
        %v1338 = vunpack.c.l.b16 %v1212
        %v1339 = vunpack.c.l.b16 %v1213
        %v1340 = vunpack.c.l.b16 %v1214
        %v1341 = vunpack.c.l.b16 %v1215
        %v1342 = vunpack.c.h.b16 %v1210
        %v1343 = vunpack.c.h.b16 %v1211
        %v1344 = vunpack.c.h.b16 %v1212
        %v1345 = vunpack.c.h.b16 %v1213
        %v1346 = vunpack.c.h.b16 %v1214
        %v1347 = vunpack.c.h.b16 %v1215
        %v1348 = vunpack.c.l.b16 %v1216
        %v1349 = vunpack.c.l.b16 %v1217
        %v1350 = vunpack.c.l.b16 %v1218
        %v1351 = vunpack.c.l.b16 %v1219
        %v1352 = vunpack.c.l.b16 %v1220
        %v1353 = vunpack.c.l.b16 %v1221
        %v1354 = vunpack.c.h.b16 %v1216
        %v1355 = vunpack.c.h.b16 %v1217
        %v1356 = vunpack.c.h.b16 %v1218
        %v1357 = vunpack.c.h.b16 %v1219
        %v1358 = vunpack.c.h.b16 %v1220
        %v1359 = vunpack.c.h.b16 %v1221
        %v1360 = vunpack.c.l.b16 %v1222
        %v1361 = vunpack.c.l.b16 %v1223
        %v1362 = vunpack.c.l.b16 %v1224
        %v1363 = vunpack.c.l.b16 %v1225
        %v1364 = vunpack.c.l.b16 %v1226
        %v1365 = vunpack.c.l.b16 %v1227
        %v1366 = vunpack.c.h.b16 %v1222
        %v1367 = vunpack.c.h.b16 %v1223
        %v1368 = vunpack.c.h.b16 %v1224
        %v1369 = vunpack.c.h.b16 %v1225
        %v1370 = vunpack.c.h.b16 %v1226
        %v1371 = vunpack.c.h.b16 %v1227
        %v1372 = vpack.c.b16 %v1277, %v1276
        %v1373 = vpack.c.b16 %v1279, %v1278
        %v1374 = vpack.c.b16 %v1281, %v1280
        %v1375 = vpack.c.b16 %v1283, %v1282
        %v1376 = vpack.c.b16 %v1285, %v1284
        %v1377 = vpack.c.b16 %v1287, %v1286
        %v1378 = vpack.c.b16 %v1289, %v1288
        %v1379 = vpack.c.b16 %v1291, %v1290
        %v1380 = vpack.c.b16 %v1293, %v1292
        %v1381 = vpack.c.b16 %v1295, %v1294
        %v1382 = vpack.c.b16 %v1297, %v1296
        %v1383 = vpack.c.b16 %v1299, %v1298
        %v1384 = vpack.c.b16 %v1301, %v1300
        %v1385 = vpack.c.b16 %v1303, %v1302
        %v1386 = vpack.c.b16 %v1305, %v1304
        %v1387 = vpack.c.b16 %v1307, %v1306
        %v1388 = vpack.c.b16 %v1309, %v1308
        %v1389 = vpack.c.b16 %v1311, %v1310
        %v1390 = vpack.c.b16 %v1313, %v1312
        %v1391 = vpack.c.b16 %v1315, %v1314
        %v1392 = vpack.c.b16 %v1317, %v1316
        %v1393 = vpack.c.b16 %v1319, %v1318
        %v1394 = vpack.c.b16 %v1321, %v1320
        %v1395 = vpack.c.b16 %v1323, %v1322
        %v1396 = vpack.c.b16 %v1325, %v1324
        %v1397 = vpack.c.b16 %v1327, %v1326
        %v1398 = vpack.c.b16 %v1329, %v1328
        %v1399 = vpack.c.b16 %v1331, %v1330
        %v1400 = vpack.c.b16 %v1333, %v1332
        %v1401 = vpack.c.b16 %v1335, %v1334
        %v1402 = vpack.c.b16 %v1337, %v1336
        %v1403 = vpack.c.b16 %v1339, %v1338
        %v1404 = vpack.c.b16 %v1341, %v1340
        %v1405 = vpack.c.b16 %v1343, %v1342
        %v1406 = vpack.c.b16 %v1345, %v1344
        %v1407 = vpack.c.b16 %v1347, %v1346
        %v1408 = vpack.c.b16 %v1349, %v1348
        %v1409 = vpack.c.b16 %v1351, %v1350
        %v1410 = vpack.c.b16 %v1353, %v1352
        %v1411 = vpack.c.b16 %v1355, %v1354
        %v1412 = vpack.c.b16 %v1357, %v1356
        %v1413 = vpack.c.b16 %v1359, %v1358
        %v1414 = vpack.c.b16 %v1361, %v1360
        %v1415 = vpack.c.b16 %v1363, %v1362
        %v1416 = vpack.c.b16 %v1365, %v1364
        %v1417 = vpack.c.b16 %v1367, %v1366
        %v1418 = vpack.c.b16 %v1369, %v1368
        %v1419 = vpack.c.b16 %v1371, %v1370
        %1468 = vst [vmem:[%s212] sm:$0xff] %v1372
        %1469 = vst [vmem:[%s212 + $0x8] sm:$0xff] %v1373
        %1470 = vst [vmem:[%s212 + $0x10] sm:$0xff] %v1374
        %1471 = vst [vmem:[%s212 + $0x18] sm:$0xff] %v1375
        %1472 = vst [vmem:[%s212 + $0x20] sm:$0xff] %v1376
        %1473 = vst [vmem:[%s212 + $0x28] sm:$0xff] %v1377
        %1474 = vst [vmem:[%s212 + $0x30] sm:$0xff] %v1378
        %1475 = vst [vmem:[%s212 + $0x38] sm:$0xff] %v1379
        %1476 = vst [vmem:[%s212 + $0x40] sm:$0xff] %v1380
        %1477 = vst [vmem:[%s212 + $0x48] sm:$0xff] %v1381
        %1478 = vst [vmem:[%s212 + $0x50] sm:$0xff] %v1382
        %1479 = vst [vmem:[%s212 + $0x58] sm:$0xff] %v1383
        %1480 = vst [vmem:[%s212 + $0x60] sm:$0xff] %v1384
        %1481 = vst [vmem:[%s212 + $0x68] sm:$0xff] %v1385
        %1482 = vst [vmem:[%s212 + $0x70] sm:$0xff] %v1386
        %1483 = vst [vmem:[%s212 + $0x78] sm:$0xff] %v1387
        %1484 = vst [vmem:[%s212 + $0x80] sm:$0xff] %v1388
        %1485 = vst [vmem:[%s212 + $0x88] sm:$0xff] %v1389
        %1486 = vst [vmem:[%s212 + $0x90] sm:$0xff] %v1390
        %1487 = vst [vmem:[%s212 + $0x98] sm:$0xff] %v1391
        %1488 = vst [vmem:[%s212 + $0xa0] sm:$0xff] %v1392
        %1489 = vst [vmem:[%s212 + $0xa8] sm:$0xff] %v1393
        %1490 = vst [vmem:[%s212 + $0xb0] sm:$0xff] %v1394
        %1491 = vst [vmem:[%s212 + $0xb8] sm:$0xff] %v1395
        %1492 = vst [vmem:[%s212 + $0xc0] sm:$0xff] %v1396
        %1493 = vst [vmem:[%s212 + $0xc8] sm:$0xff] %v1397
        %1494 = vst [vmem:[%s212 + $0xd0] sm:$0xff] %v1398
        %1495 = vst [vmem:[%s212 + $0xd8] sm:$0xff] %v1399
        %1496 = vst [vmem:[%s212 + $0xe0] sm:$0xff] %v1400
        %1497 = vst [vmem:[%s212 + $0xe8] sm:$0xff] %v1401
        %1498 = vst [vmem:[%s212 + $0xf0] sm:$0xff] %v1402
        %1499 = vst [vmem:[%s212 + $0xf8] sm:$0xff] %v1403
        %1500 = vst [vmem:[%s212 + $0x100] sm:$0xff] %v1404
        %1501 = vst [vmem:[%s212 + $0x108] sm:$0xff] %v1405
        %1502 = vst [vmem:[%s212 + $0x110] sm:$0xff] %v1406
        %1503 = vst [vmem:[%s212 + $0x118] sm:$0xff] %v1407
        %1504 = vst [vmem:[%s212 + $0x120] sm:$0xff] %v1408
        %1505 = vst [vmem:[%s212 + $0x128] sm:$0xff] %v1409
        %1506 = vst [vmem:[%s212 + $0x130] sm:$0xff] %v1410
        %1507 = vst [vmem:[%s212 + $0x138] sm:$0xff] %v1411
        %1508 = vst [vmem:[%s212 + $0x140] sm:$0xff] %v1412
        %1509 = vst [vmem:[%s212 + $0x148] sm:$0xff] %v1413
        %1510 = vst [vmem:[%s212 + $0x150] sm:$0xff] %v1414
        %1511 = vst [vmem:[%s212 + $0x158] sm:$0xff] %v1415
        %1512 = vst [vmem:[%s212 + $0x160] sm:$0xff] %v1416
        %1513 = vst [vmem:[%s212 + $0x168] sm:$0xff] %v1417
        %1514 = vst [vmem:[%s212 + $0x170] sm:$0xff] %v1418
        %1515 = vst [vmem:[%s212 + $0x178] sm:$0xff] %v1419
        %s1516 = sand.u32 %s105, 1
        %s1517 = scalar_lea.sflag [#allocation4], %s1516
        %s1518 = sand.u32 %s105, 1
        %s1519 = smul.addr %s1518, 384
        %s1520 = scalar_lea.vmem [#allocation7], %s1519
        // Predicated region
        $region37: #{tpu_custom_call.1} parent=27 // pred_check
          %p1521 = pneg %p115
        $region38: #{tpu_custom_call.1} parent=27 // pred_check_branch
          %1523 = sbr.rel (%p1521) target = $region40
        $region39: #{tpu_custom_call.1} parent=27 // pred_region
          %s1524 = smul.u32 16, %s26
          %s1525 = smul.u32 6, %s27
          %s1527 = ssub.s32 6144, 6144
          %1528 = vsyncadd %s1517, %s1527
          %s1529 = smul.addr %s1524, 6
          %s1530 = sadd.s32 %s1525, %s1529
          %s1531 = smul.addr %s25, 96
          %s1532 = sadd.s32 %s1530, %s1531
          %s1533 = smul.addr %s1532, 64
          %s1534 = scalar_lea.hbm %s2, %s1533
          %s1535 = sshll.u32 %s1520, 4
          %s1536 = int_to_ptr.vmem [resolvable:$true] %s1535
          %1541 = dma.vmem_to_hbm [thread:$0]  %s1536, 6144, %s1534, %s1517, 384, 384, 24
        $region40: #{tpu_custom_call.1} parent=27 // pred_fallthru
          _
      $region28: #{tpu_custom_call.1} parent=5 // pred_fallthru
        _
      %p1542 = scmp.le.s32.totalorder 2, %s15
      // Predicated region
      $region41: #{tpu_custom_call.1} parent=5 // pred_check
        %p1543 = pneg %p1542
      $region42: #{tpu_custom_call.1} parent=5 // pred_check_branch
        %1545 = sbr.rel (%p1543) target = $region44
      $region43: #{tpu_custom_call.1} parent=5 // pred_region
        %s1546 = ssub.s32 %s15, 2
        // Predicated region
        $region45: #{tpu_custom_call.1} parent=43 // pred_check
          %p1547 = pneg %p121
        $region46: #{tpu_custom_call.1} parent=43 // pred_check_branch
          %1549 = sbr.rel (%p1547) target = $region48
        $region47: #{tpu_custom_call.1} parent=43 // pred_region
          %s1550 = sand.u32 %s106, 1
          %s1551 = scalar_lea.sflag [#allocation4], %s1550
          %s1552 = sand.u32 %s106, 1
          %s1553 = smul.addr %s1552, 384
          %s1554 = scalar_lea.vmem [#allocation7], %s1553
          %1555 = dma.done %s1551, 6144
        $region48: #{tpu_custom_call.1} parent=43 // pred_fallthru
          _
      $region44: #{tpu_custom_call.1} parent=5 // pred_fallthru
        _
    $region6: #{tpu_custom_call.1} parent=1 // loop_footer
      %s19 = sadd.s32 1, %s15
    $region7: #{tpu_custom_call.1} parent=1 // loop_footer_branch
      %14 = sbr.rel target = $region3
    $region8: #{tpu_custom_call.1} parent=1 // loop_exit
      _
    %1556 = vsyncpa [#allocation3], 1
    %s1557 = scalar_lea.sflag [#allocation3], 1
    %1558 = vsyncpa %s1557, 1
    %1559 = vsyncpa [#allocation6], 1
    %1560 = vsyncpa [#allocation4], 1
    %s1561 = scalar_lea.sflag [#allocation4], 1
    %1562 = vsyncpa %s1561, 1

</llo_original>
